<compile_context>
chip_gen: v7x
topology: tpu7x:2x2x1
jax: 0.10.0
libtpu: 0.0.40
codegen_flags: <defaults>
</compile_context>

<pallas_src>
import jax
import jax.numpy as jnp
from jax.experimental import pallas as pl
from jax.experimental.pallas import tpu as pltpu


def _pick_tile_m(m, target=512):
    """Largest multiple-of-8 divisor of m that is <= target (else m itself)."""
    if m <= target:
        return m
    t = (target // 8) * 8
    while t >= 8:
        if m % t == 0:
            return t
        t -= 8
    return m


def _substitute_blocks(ys):
    """activation_for_substitute over a list of per-sub-block f32 tensors.

    out_k = y_k + relu(mean_k y) - mean_k y   (so mean_k(out) == relu(mean_k y)).
    """
    m = ys[0]
    for y in ys[1:]:
        m = m + y
    m = m * (1.0 / len(ys))
    delta = jnp.maximum(m, 0.0) - m
    return [y + delta for y in ys]


# ----------------------------------------------------------------------------
# Stage 1: 1x1 conv (broadcast input) + BN + mean + ReLU + substitute.
# n_block folded into the matmul N dimension -> one dense MXU matmul per tile.
# ----------------------------------------------------------------------------
def conv1_bn_substitute(x_bf, w1c, s1c, b1c, n_block):
    M, cin = x_bf.shape
    c1 = w1c.shape[1]
    width = c1 // n_block
    tile_m = _pick_tile_m(M)

    def kernel(x_ref, w_ref, s_ref, b_ref, o_ref):
        y = jnp.dot(x_ref[...], w_ref[...], preferred_element_type=jnp.float32)
        y = y * s_ref[...] + b_ref[...]                       # f32 epilogue
        ys = [y[:, k * width:(k + 1) * width] for k in range(n_block)]
        o_ref[...] = jnp.concatenate(_substitute_blocks(ys), axis=-1).astype(o_ref.dtype)

    return pl.pallas_call(
        kernel,
        out_shape=jax.ShapeDtypeStruct((M, c1), jnp.bfloat16),
        grid=(M // tile_m,),
        in_specs=[
            pl.BlockSpec((tile_m, cin), lambda i: (i, 0)),
            pl.BlockSpec((cin, c1), lambda i: (0, 0)),        # resident across grid
            pl.BlockSpec((1, c1), lambda i: (0, 0)),
            pl.BlockSpec((1, c1), lambda i: (0, 0)),
        ],
        out_specs=pl.BlockSpec((tile_m, c1), lambda i: (i, 0)),
        compiler_params=pltpu.CompilerParams(dimension_semantics=("parallel",)),
    )(x_bf, w1c, s1c, b1c)


# ----------------------------------------------------------------------------
# Stage 2: per-sub-block 3x3 conv (pad=1, stride=1) + BN + mean + ReLU + substitute.
# One batch image per grid step; padded/shifted views live only in VMEM/vregs.
# ----------------------------------------------------------------------------
def conv2_bn_substitute(xs1_4d, w2, s2, b2, n_block):
    B, H, W, c1 = xs1_4d.shape
    width = c1 // n_block

    def kernel(x_ref, w_ref, s_ref, b_ref, o_ref):
        xv = x_ref[0]                                         # (H, W, c1) bf16
        zrow = jnp.zeros((1, W, c1), xv.dtype)
        xv = jnp.concatenate([zrow, xv, zrow], axis=0)        # (H+2, W, c1)
        zcol = jnp.zeros((H + 2, 1, c1), xv.dtype)
        xp = jnp.concatenate([zcol, xv, zcol], axis=1)        # (H+2, W+2, c1)

        wv = w_ref[...]                                       # (n, 3, 3, width, width) bf16
        sv = s_ref[...]                                       # (n, 1, width) f32
        bv = b_ref[...]

        accs = [jnp.zeros((H * W, width), jnp.float32) for _ in range(n_block)]
        for dy in range(3):                                   # 9 shifted matmuls
            for dx in range(3):
                xs = xp[dy:dy + H, dx:dx + W, :].reshape(H * W, c1)
                for k in range(n_block):
                    accs[k] = accs[k] + jnp.dot(
                        xs[:, k * width:(k + 1) * width], wv[k, dy, dx],
                        preferred_element_type=jnp.float32)

        ys = [accs[k] * sv[k] + bv[k] for k in range(n_block)]
        out = jnp.concatenate(_substitute_blocks(ys), axis=-1)          # (H*W, c1) f32
        o_ref[0] = out.reshape(H, W, c1).astype(o_ref.dtype)

    return pl.pallas_call(
        kernel,
        out_shape=jax.ShapeDtypeStruct((B, H, W, c1), jnp.bfloat16),
        grid=(B,),
        in_specs=[
            pl.BlockSpec((1, H, W, c1), lambda b: (b, 0, 0, 0)),
            pl.BlockSpec(w2.shape, lambda b: (0, 0, 0, 0, 0)),          # resident
            pl.BlockSpec(s2.shape, lambda b: (0, 0, 0)),
            pl.BlockSpec(b2.shape, lambda b: (0, 0, 0)),
        ],
        out_specs=pl.BlockSpec((1, H, W, c1), lambda b: (b, 0, 0, 0)),
        compiler_params=pltpu.CompilerParams(dimension_semantics=("parallel",)),
    )(xs1_4d, w2, s2, b2)


# ----------------------------------------------------------------------------
# Stage 3: per-sub-block 1x1 conv + BN + (shortcut / n_block) + mean + ReLU + substitute.
# ----------------------------------------------------------------------------
def conv3_bn_residual_substitute(xs2_2d, x_res, w3, s3, b3, n_block):
    M, c1 = xs2_2d.shape
    width = c1 // n_block
    outp = w3.shape[-1]
    c3 = n_block * outp
    tile_m = _pick_tile_m(M)
    inv_n = 1.0 / n_block

    def kernel(x_ref, r_ref, w_ref, s_ref, b_ref, o_ref):
        x = x_ref[...]                                        # (tile_m, c1) bf16
        res = r_ref[...] * inv_n                              # (tile_m, outp) f32
        wv, sv, bv = w_ref[...], s_ref[...], b_ref[...]
        ys = []
        for k in range(n_block):
            y = jnp.dot(x[:, k * width:(k + 1) * width], wv[k],
                        preferred_element_type=jnp.float32)
            ys.append(y * sv[k] + bv[k] + res)
        o_ref[...] = jnp.concatenate(_substitute_blocks(ys), axis=-1).astype(o_ref.dtype)

    return pl.pallas_call(
        kernel,
        out_shape=jax.ShapeDtypeStruct((M, c3), jnp.float32),
        grid=(M // tile_m,),
        in_specs=[
            pl.BlockSpec((tile_m, c1), lambda i: (i, 0)),
            pl.BlockSpec((tile_m, outp), lambda i: (i, 0)),
            pl.BlockSpec((n_block, width, outp), lambda i: (0, 0, 0)),  # resident
            pl.BlockSpec((n_block, 1, outp), lambda i: (0, 0, 0)),
            pl.BlockSpec((n_block, 1, outp), lambda i: (0, 0, 0)),
        ],
        out_specs=pl.BlockSpec((tile_m, c3), lambda i: (i, 0)),
        compiler_params=pltpu.CompilerParams(dimension_semantics=("parallel",)),
    )(xs2_2d, x_res, w3, s3, b3)


# ----------------------------------------------------------------------------
# Parameters (deterministic synthetic init; BN folded to scale/bias; block-major concat).
# ----------------------------------------------------------------------------
def init_params(key, inplanes, planes, n_block, base_width=64, cardinality=1):
    width = int(planes * (base_width / 64)) * cardinality
    outplanes = planes * 4
    ks = jax.random.split(key, 6)

    def folded_bn(k, c):
        k1, k2 = jax.random.split(k)
        gamma = 1.0 + 0.1 * jax.random.normal(k1, (n_block, c), jnp.float32)
        beta = 0.1 * jax.random.normal(k2, (n_block, c), jnp.float32)
        eps = 1e-5  # running_mean=0, running_var=1 folded in
        return gamma / jnp.sqrt(1.0 + eps), beta

    # conv1 (1x1): per-block [Cin, width] concatenated block-major -> [Cin, n_block*width]
    w1 = jax.random.normal(ks[0], (n_block, inplanes, width), jnp.float32) / jnp.sqrt(inplanes)
    w1c = jnp.concatenate([w1[k] for k in range(n_block)], axis=-1).astype(jnp.bfloat16)
    s1, b1 = folded_bn(ks[1], width)
    s1c = s1.reshape(1, n_block * width)
    b1c = b1.reshape(1, n_block * width)

    # conv2 (3x3): [n_block, dy, dx, Cin, Cout]
    w2 = (jax.random.normal(ks[2], (n_block, 3, 3, width, width), jnp.float32)
          / jnp.sqrt(9.0 * width)).astype(jnp.bfloat16)
    s2, b2 = folded_bn(ks[3], width)
    s2 = s2.reshape(n_block, 1, width)
    b2 = b2.reshape(n_block, 1, width)

    # conv3 (1x1): [n_block, width, outplanes]
    w3 = (jax.random.normal(ks[4], (n_block, width, outplanes), jnp.float32)
          / jnp.sqrt(width)).astype(jnp.bfloat16)
    s3, b3 = folded_bn(ks[5], outplanes)
    s3 = s3.reshape(n_block, 1, outplanes)
    b3 = b3.reshape(n_block, 1, outplanes)

    return dict(w1c=w1c, s1c=s1c, b1c=b1c, w2=w2, s2=s2, b2=b2, w3=w3, s3=s3, b3=b3,
                width=width, outplanes=outplanes)


# ----------------------------------------------------------------------------
# Forward = BottleneckSub.train_forward
# ----------------------------------------------------------------------------
def bottleneck_sub_forward(x_nchw, params, n_block):
    B, cin, H, W = x_nchw.shape
    width, outplanes = params["width"], params["outplanes"]
    assert cin == outplanes, "residual path (no downsample) needs inplanes == 4*planes"
    M = B * H * W

    x_nhwc = jnp.transpose(x_nchw, (0, 2, 3, 1)).reshape(M, cin)   # f32 (shortcut path)
    x_bf = x_nhwc.astype(jnp.bfloat16)                             # bf16 matmul operand

    # conv1 (1x1, broadcast) -> mean -> act1 -> aa(identity) -> substitute
    xs1 = conv1_bn_substitute(x_bf, params["w1c"], params["s1c"], params["b1c"], n_block)

    # conv2 (3x3) -> mean -> drop_block(id) -> act2 -> aa(id) -> substitute
    xs2 = conv2_bn_substitute(xs1.reshape(B, H, W, n_block * width),
                              params["w2"], params["s2"], params["b2"], n_block)

    # conv3 (1x1) -> (+shortcut/n_block) -> mean -> act3 -> substitute
    xs3 = conv3_bn_residual_substitute(xs2.reshape(M, n_block * width), x_nhwc,
                                       params["w3"], params["s3"], params["b3"], n_block)

    # back to PyTorch layout [B, outplanes, H, W, n_block]
    out = xs3.reshape(B, H, W, n_block, outplanes)
    return jnp.transpose(out, (0, 4, 1, 2, 3))


if __name__ == "__main__":
    key = jax.random.PRNGKey(0)
    kx, kp = jax.random.split(key)

    B, planes, H, W, n_block = 2, 8, 8, 8, 4
    inplanes = planes * 4          # 32, must equal outplanes for the residual add

    x = jax.random.normal(kx, (B, inplanes, H, W), jnp.float32)
    params = init_params(kp, inplanes, planes, n_block)

    out = bottleneck_sub_forward(x, params, n_block)
    out = jax.block_until_ready(out)
    assert out.shape == (B, planes * 4, H, W, n_block)
    assert bool(jnp.all(jnp.isfinite(out)))
    print("KERNEL_OK")
</pallas_src>

<mosaic_0001>
module attributes {stable_mosaic.version = 11 : i64} {
  func.func @kernel(%arg0: i32, %arg1: memref<128x32xbf16, #tpu.memory_space<vmem>>, %arg2: memref<32x32xbf16, #tpu.memory_space<vmem>>, %arg3: memref<1x32xf32, #tpu.memory_space<vmem>>, %arg4: memref<1x32xf32, #tpu.memory_space<vmem>>, %arg5: memref<128x32xbf16, #tpu.memory_space<vmem>>) attributes {dimension_semantics = [#tpu.dimension_semantics<parallel>], iteration_bounds = array<i64: 1>, scalar_prefetch = 0 : i64, scratch_operands = 0 : i64, tpu.core_type = #tpu.core_type<tc>, window_params = [{transform_indices = @transform_0, window_bounds = array<i64: 128, 32>}, {pipeline_mode = #tpu.pipeline_mode<synchronous>, transform_indices = @transform_1, window_bounds = array<i64: 32, 32>}, {pipeline_mode = #tpu.pipeline_mode<synchronous>, transform_indices = @transform_2, window_bounds = array<i64: 1, 32>}, {pipeline_mode = #tpu.pipeline_mode<synchronous>, transform_indices = @transform_3, window_bounds = array<i64: 1, 32>}, {transform_indices = @transform_4, window_bounds = array<i64: 128, 32>}]} {
    %c0 = arith.constant 0 : index
    %c0_0 = arith.constant 0 : index
    %0 = vector.load %arg1[%c0, %c0_0] : memref<128x32xbf16, #tpu.memory_space<vmem>>, vector<128x32xbf16>
    %c0_1 = arith.constant 0 : index
    %c0_2 = arith.constant 0 : index
    %1 = vector.load %arg2[%c0_1, %c0_2] : memref<32x32xbf16, #tpu.memory_space<vmem>>, vector<32x32xbf16>
    %cst = arith.constant dense<0.000000e+00> : vector<128x32xf32>
    %2 = tpu.matmul %0, %1, %cst {dimension_numbers = #tpu.dot_dimension_numbers<[1], [0], [0], [1], [0, 0, 1, 1], [], []>} : vector<128x32xbf16>, vector<32x32xbf16>, vector<128x32xf32> -> vector<128x32xf32>
    %c0_3 = arith.constant 0 : index
    %c0_4 = arith.constant 0 : index
    %3 = vector.load %arg3[%c0_3, %c0_4] : memref<1x32xf32, #tpu.memory_space<vmem>>, vector<1x32xf32>
    %4 = vector.broadcast %3 : vector<1x32xf32> to vector<128x32xf32>
    %5 = arith.mulf %2, %4 : vector<128x32xf32>
    %c0_5 = arith.constant 0 : index
    %c0_6 = arith.constant 0 : index
    %6 = vector.load %arg4[%c0_5, %c0_6] : memref<1x32xf32, #tpu.memory_space<vmem>>, vector<1x32xf32>
    %7 = vector.broadcast %6 : vector<1x32xf32> to vector<128x32xf32>
    %8 = arith.addf %5, %7 : vector<128x32xf32>
    %9 = vector.extract_strided_slice %8 {offsets = [0, 0], sizes = [128, 8], strides = [1, 1]} : vector<128x32xf32> to vector<128x8xf32>
    %10 = vector.extract_strided_slice %8 {offsets = [0, 8], sizes = [128, 8], strides = [1, 1]} : vector<128x32xf32> to vector<128x8xf32>
    %11 = vector.extract_strided_slice %8 {offsets = [0, 16], sizes = [128, 8], strides = [1, 1]} : vector<128x32xf32> to vector<128x8xf32>
    %12 = vector.extract_strided_slice %8 {offsets = [0, 24], sizes = [128, 8], strides = [1, 1]} : vector<128x32xf32> to vector<128x8xf32>
    %13 = arith.addf %9, %10 : vector<128x8xf32>
    %14 = arith.addf %13, %11 : vector<128x8xf32>
    %15 = arith.addf %14, %12 : vector<128x8xf32>
    %cst_7 = arith.constant 2.500000e-01 : f32
    %16 = vector.broadcast %cst_7 : f32 to vector<128x8xf32>
    %17 = arith.mulf %15, %16 : vector<128x8xf32>
    %cst_8 = arith.constant 0.000000e+00 : f32
    %18 = vector.broadcast %cst_8 : f32 to vector<128x8xf32>
    %19 = arith.maximumf %17, %18 : vector<128x8xf32>
    %20 = arith.subf %19, %17 : vector<128x8xf32>
    %21 = arith.addf %9, %20 : vector<128x8xf32>
    %22 = arith.addf %10, %20 : vector<128x8xf32>
    %23 = arith.addf %11, %20 : vector<128x8xf32>
    %24 = arith.addf %12, %20 : vector<128x8xf32>
    %25 = tpu.concatenate %21, %22, %23, %24 in 1 : vector<128x8xf32>, vector<128x8xf32>, vector<128x8xf32>, vector<128x8xf32> -> vector<128x32xf32>
    %26 = arith.truncf %25 : vector<128x32xf32> to vector<128x32xbf16>
    %c0_9 = arith.constant 0 : index
    %c0_10 = arith.constant 0 : index
    %27 = vector.load %arg5[%c0_9, %c0_10] : memref<128x32xbf16, #tpu.memory_space<vmem>>, vector<128x32xbf16>
    tpu.vector_store %arg5[%c0_9, %c0_10], %26 {strides = array<i32>} : memref<128x32xbf16, #tpu.memory_space<vmem>>, vector<128x32xbf16>,
    return
  }
  func.func @transform_0(%arg0: i32) -> (i32, i32) {
    %c0_i32 = arith.constant 0 : i32
    %c0_i32_0 = arith.constant 0 : i32
    return %arg0, %c0_i32 : i32, i32
  }
  func.func @transform_1(%arg0: i32) -> (i32, i32) {
    %c0_i32 = arith.constant 0 : i32
    %c0_i32_0 = arith.constant 0 : i32
    %c0_i32_1 = arith.constant 0 : i32
    return %c0_i32, %c0_i32_0 : i32, i32
  }
  func.func @transform_2(%arg0: i32) -> (i32, i32) {
    %c0_i32 = arith.constant 0 : i32
    %c0_i32_0 = arith.constant 0 : i32
    %c0_i32_1 = arith.constant 0 : i32
    return %c0_i32, %c0_i32_0 : i32, i32
  }
  func.func @transform_3(%arg0: i32) -> (i32, i32) {
    %c0_i32 = arith.constant 0 : i32
    %c0_i32_0 = arith.constant 0 : i32
    %c0_i32_1 = arith.constant 0 : i32
    return %c0_i32, %c0_i32_0 : i32, i32
  }
  func.func @transform_4(%arg0: i32) -> (i32, i32) {
    %c0_i32 = arith.constant 0 : i32
    %c0_i32_0 = arith.constant 0 : i32
    return %arg0, %c0_i32 : i32, i32
  }
}

</mosaic_0001>

<llo_original>
// kernel: tpu_custom_call.1
$region0: #{tpu_custom_call.1}
  #allocation0 [shape = 'u32[]', space=smem, size = 0x4, offset = 0x4, fixed_abs, tag = 'smem constant byte address 0x4 - core index']
  #allocation1 [shape = 'u32[144,128]{1,0:T(1,128)}', space=vmem, size = 0x12000, scoped, tag = 'internal scratch']
  %s0 = inlined_call_operand.vmem [shape: bf16[128,32], index: 0, kind: input, shape index: {}]
  %s1 = inlined_call_operand.vmem [shape: bf16[32,32], index: 1, kind: input, shape index: {}]
  %s2 = inlined_call_operand.vmem [shape: f32[1,32], index: 2, kind: input, shape index: {}]
  %s3 = inlined_call_operand.vmem [shape: f32[1,32], index: 3, kind: input, shape index: {}]
  %s4 = inlined_call_operand.vmem [shape: bf16[128,32], index: 4, kind: output, shape index: {}]
  %s5 = sld [smem:[#allocation0]]
  $region26: #{tpu_custom_call.1} parent=0
    _
  %s7 = ssub.s32 1, %s5
  %s8 = scalar_select 0, %s7, %s5
  // Predicated region
  $region2: #{tpu_custom_call.1} parent=0 // pred_check
    _
  $region3: #{tpu_custom_call.1} parent=0 // pred_check_branch
    %10 = sbr.rel (0) target = $region5
  $region4: #{tpu_custom_call.1} parent=0 // pred_region
    _
  $region5: #{tpu_custom_call.1} parent=0 // pred_fallthru
    _
  // Predicated region
  $region6: #{tpu_custom_call.1} parent=0 // pred_check
    _
  $region7: #{tpu_custom_call.1} parent=0 // pred_check_branch
    %12 = sbr.rel (0) target = $region9
  $region8: #{tpu_custom_call.1} parent=0 // pred_region
    _
  $region9: #{tpu_custom_call.1} parent=0 // pred_fallthru
    _
  // Predicated region
  $region10: #{tpu_custom_call.1} parent=0 // pred_check
    _
  $region11: #{tpu_custom_call.1} parent=0 // pred_check_branch
    %14 = sbr.rel (0) target = $region13
  $region12: #{tpu_custom_call.1} parent=0 // pred_region
    _
  $region13: #{tpu_custom_call.1} parent=0 // pred_fallthru
    _
  // Predicated region
  $region14: #{tpu_custom_call.1} parent=0 // pred_check
    _
  $region15: #{tpu_custom_call.1} parent=0 // pred_check_branch
    %16 = sbr.rel (0) target = $region17
  $region16: #{tpu_custom_call.1} parent=0 // pred_region
    _
  $region17: #{tpu_custom_call.1} parent=0 // pred_fallthru
    _
  %v18 = vld [vmem:[%s0] sm:$0xf]
  %v19 = vld [vmem:[%s0 + $0x4] sm:$0xf]
  %v20 = vld [vmem:[%s0 + $0x8] sm:$0xf]
  %v21 = vld [vmem:[%s0 + $0xc] sm:$0xf]
  %v22 = vld [vmem:[%s0 + $0x10] sm:$0xf]
  %v23 = vld [vmem:[%s0 + $0x14] sm:$0xf]
  %v24 = vld [vmem:[%s0 + $0x18] sm:$0xf]
  %v25 = vld [vmem:[%s0 + $0x1c] sm:$0xf]
  %v26 = vld [vmem:[%s0 + $0x20] sm:$0xf]
  %v27 = vld [vmem:[%s0 + $0x24] sm:$0xf]
  %v28 = vld [vmem:[%s0 + $0x28] sm:$0xf]
  %v29 = vld [vmem:[%s0 + $0x2c] sm:$0xf]
  %v30 = vld [vmem:[%s0 + $0x30] sm:$0xf]
  %v31 = vld [vmem:[%s0 + $0x34] sm:$0xf]
  %v32 = vld [vmem:[%s0 + $0x38] sm:$0xf]
  %v33 = vld [vmem:[%s0 + $0x3c] sm:$0xf]
  %v34 = vld [vmem:[%s1] sm:$0xf]
  %v35 = vld [vmem:[%s1 + $0x4] sm:$0xf]
  %v36 = vld [vmem:[%s1 + $0x8] sm:$0xf]
  %v37 = vld [vmem:[%s1 + $0xc] sm:$0xf]
  %v54 = vunpack.c.l.b16 %v18
  %v55 = vunpack.c.l.b16 %v19
  %v56 = vunpack.c.l.b16 %v20
  %v57 = vunpack.c.l.b16 %v21
  %v58 = vunpack.c.l.b16 %v22
  %v59 = vunpack.c.l.b16 %v23
  %v60 = vunpack.c.l.b16 %v24
  %v61 = vunpack.c.l.b16 %v25
  %v62 = vunpack.c.l.b16 %v26
  %v63 = vunpack.c.l.b16 %v27
  %v64 = vunpack.c.l.b16 %v28
  %v65 = vunpack.c.l.b16 %v29
  %v66 = vunpack.c.l.b16 %v30
  %v67 = vunpack.c.l.b16 %v31
  %v68 = vunpack.c.l.b16 %v32
  %v69 = vunpack.c.l.b16 %v33
  %v70 = vpack.c.b16 %v55, %v54
  %v71 = vpack.c.b16 %v57, %v56
  %v72 = vpack.c.b16 %v59, %v58
  %v73 = vpack.c.b16 %v61, %v60
  %v74 = vpack.c.b16 %v63, %v62
  %v75 = vpack.c.b16 %v65, %v64
  %v76 = vpack.c.b16 %v67, %v66
  %v77 = vpack.c.b16 %v69, %v68
  %v82 = vunpack.c.l.b16 %v34
  %v83 = vunpack.c.l.b16 %v35
  %v84 = vunpack.c.l.b16 %v36
  %v85 = vunpack.c.l.b16 %v37
  %v86 = vpack.c.b16 %v83, %v82
  %v87 = vpack.c.b16 %v85, %v84
  %vm90 = vcmask 261120
  %v92 = vsel %vm90, %v70, 0
  %v95 = vsel %vm90, %v71, 0
  %v98 = vsel %vm90, %v72, 0
  %v101 = vsel %vm90, %v73, 0
  %v104 = vsel %vm90, %v74, 0
  %v107 = vsel %vm90, %v75, 0
  %v110 = vsel %vm90, %v76, 0
  %v113 = vsel %vm90, %v77, 0
  %115 = vmatprep.subr.bf16.mxu0 0
  %116 = vmatpush1.bf16.msra.mxu0 %v86
  %117 = vmatprep.subr.bf16.mxu0 0
  %118 = vmatpush1.bf16.msra.mxu0 %v87
  %119 = vmatprep.subr.bf16.mxu0 0
  %120 = vmatpush1.bf16.msra.mxu0 0
  %121 = vmatprep.subr.bf16.mxu0 0
  %122 = vmatpush1.bf16.msra.mxu0 0
  %123 = vmatprep.subr.bf16.mxu0 0
  %124 = vmatpush1.bf16.msra.mxu0 0
  %125 = vmatprep.subr.bf16.mxu0 0
  %126 = vmatpush1.bf16.msra.mxu0 0
  %127 = vmatprep.subr.bf16.mxu0 0
  %128 = vmatpush1.bf16.msra.mxu0 0
  %129 = vmatprep.subr.bf16.mxu0 0
  %130 = vmatpush1.bf16.msra.mxu0 0
  %131 = vmatprep.subr.bf16.mxu0 0
  %132 = vmatpush1.bf16.msra.mxu0 0
  %133 = vmatprep.subr.bf16.mxu0 0
  %134 = vmatpush1.bf16.msra.mxu0 0
  %135 = vmatprep.subr.bf16.mxu0 0
  %136 = vmatpush1.bf16.msra.mxu0 0
  %137 = vmatprep.subr.bf16.mxu0 0
  %138 = vmatpush1.bf16.msra.mxu0 0
  %139 = vmatprep.subr.bf16.mxu0 0
  %140 = vmatpush1.bf16.msra.mxu0 0
  %141 = vmatprep.subr.bf16.mxu0 0
  %142 = vmatpush1.bf16.msra.mxu0 0
  %143 = vmatprep.subr.bf16.mxu0 0
  %144 = vmatpush1.bf16.msra.mxu0 0
  %145 = vmatprep.subr.bf16.mxu0 0
  %146 = vmatpush1.bf16.msra.mxu0 0
  %147 = vmatprep.mubr.bf16.mxu0 0
  %148 = vmatmul.mubr.bf16.gmra.mrb[0].mxu0 %v92
  %v149 = vpop.f32.mrb[0].mxu0
  %v150 = vadd.f32 0.0, %v149
  %v151 = vpop.f32.mrb[0].mxu0
  %v152 = vpop.f32.mrb[0].mxu0
  %v153 = vadd.f32 0.0, %v152
  %v154 = vpop.f32.mrb[0].mxu0
  %155 = vmatprep.mubr.bf16.mxu0 0
  %156 = vmatmul.mubr.bf16.gmra.mrb[0].mxu0 %v95
  %v157 = vpop.f32.mrb[0].mxu0
  %v158 = vadd.f32 0.0, %v157
  %v159 = vpop.f32.mrb[0].mxu0
  %v160 = vpop.f32.mrb[0].mxu0
  %v161 = vadd.f32 0.0, %v160
  %v162 = vpop.f32.mrb[0].mxu0
  %163 = vmatprep.mubr.bf16.mxu0 0
  %164 = vmatmul.mubr.bf16.gmra.mrb[0].mxu0 %v98
  %v165 = vpop.f32.mrb[0].mxu0
  %v166 = vadd.f32 0.0, %v165
  %v167 = vpop.f32.mrb[0].mxu0
  %v168 = vpop.f32.mrb[0].mxu0
  %v169 = vadd.f32 0.0, %v168
  %v170 = vpop.f32.mrb[0].mxu0
  %171 = vmatprep.mubr.bf16.mxu0 0
  %172 = vmatmul.mubr.bf16.gmra.mrb[0].mxu0 %v101
  %v173 = vpop.f32.mrb[0].mxu0
  %v174 = vadd.f32 0.0, %v173
  %v175 = vpop.f32.mrb[0].mxu0
  %v176 = vpop.f32.mrb[0].mxu0
  %v177 = vadd.f32 0.0, %v176
  %v178 = vpop.f32.mrb[0].mxu0
  %179 = vmatprep.mubr.bf16.mxu0 0
  %180 = vmatmul.mubr.bf16.gmra.mrb[0].mxu0 %v104
  %v181 = vpop.f32.mrb[0].mxu0
  %v182 = vadd.f32 0.0, %v181
  %v183 = vpop.f32.mrb[0].mxu0
  %v184 = vpop.f32.mrb[0].mxu0
  %v185 = vadd.f32 0.0, %v184
  %v186 = vpop.f32.mrb[0].mxu0
  %187 = vmatprep.mubr.bf16.mxu0 0
  %188 = vmatmul.mubr.bf16.gmra.mrb[0].mxu0 %v107
  %v189 = vpop.f32.mrb[0].mxu0
  %v190 = vadd.f32 0.0, %v189
  %v191 = vpop.f32.mrb[0].mxu0
  %v192 = vpop.f32.mrb[0].mxu0
  %v193 = vadd.f32 0.0, %v192
  %v194 = vpop.f32.mrb[0].mxu0
  %195 = vmatprep.mubr.bf16.mxu0 0
  %196 = vmatmul.mubr.bf16.gmra.mrb[0].mxu0 %v110
  %v197 = vpop.f32.mrb[0].mxu0
  %v198 = vadd.f32 0.0, %v197
  %v199 = vpop.f32.mrb[0].mxu0
  %v200 = vpop.f32.mrb[0].mxu0
  %v201 = vadd.f32 0.0, %v200
  %v202 = vpop.f32.mrb[0].mxu0
  %203 = vmatprep.mubr.bf16.mxu0 0
  %204 = vmatmul.mubr.bf16.gmra.mrb[0].mxu0 %v113
  %v205 = vpop.f32.mrb[0].mxu0
  %v206 = vadd.f32 0.0, %v205
  %v207 = vpop.f32.mrb[0].mxu0
  %v208 = vpop.f32.mrb[0].mxu0
  %v209 = vadd.f32 0.0, %v208
  %v210 = vpop.f32.mrb[0].mxu0
  %211 = vdwg.mxu0
  %v212 = vld [vmem:[%s2] sm:$0x1]
  %v214 = vlaneseq
  %v215 = vshrl.u32 %v214, 7
  %v216 = vsub.s32 0, %v215
  %v217 = vrot.slane %v212, %v216
  %v219 = vmul.f32 %v150, %v217
  %v220 = vmul.f32 %v153, %v217
  %v221 = vmul.f32 %v158, %v217
  %v222 = vmul.f32 %v161, %v217
  %v223 = vmul.f32 %v166, %v217
  %v224 = vmul.f32 %v169, %v217
  %v225 = vmul.f32 %v174, %v217
  %v226 = vmul.f32 %v177, %v217
  %v227 = vmul.f32 %v182, %v217
  %v228 = vmul.f32 %v185, %v217
  %v229 = vmul.f32 %v190, %v217
  %v230 = vmul.f32 %v193, %v217
  %v231 = vmul.f32 %v198, %v217
  %v232 = vmul.f32 %v201, %v217
  %v233 = vmul.f32 %v206, %v217
  %v234 = vmul.f32 %v209, %v217
  %v235 = vld [vmem:[%s3] sm:$0x1]
  %v237 = vlaneseq
  %v238 = vshrl.u32 %v237, 7
  %v239 = vsub.s32 0, %v238
  %v240 = vrot.slane %v235, %v239
  %v242 = vadd.f32 %v219, %v240
  %v243 = vadd.f32 %v220, %v240
  %v244 = vadd.f32 %v221, %v240
  %v245 = vadd.f32 %v222, %v240
  %v246 = vadd.f32 %v223, %v240
  %v247 = vadd.f32 %v224, %v240
  %v248 = vadd.f32 %v225, %v240
  %v249 = vadd.f32 %v226, %v240
  %v250 = vadd.f32 %v227, %v240
  %v251 = vadd.f32 %v228, %v240
  %v252 = vadd.f32 %v229, %v240
  %v253 = vadd.f32 %v230, %v240
  %v254 = vadd.f32 %v231, %v240
  %v255 = vadd.f32 %v232, %v240
  %v256 = vadd.f32 %v233, %v240
  %v257 = vadd.f32 %v234, %v240
  %274 = vrot.lane.b32.xlu0 %v242, 120
  %v275 = vpop.permute.xlu0 %274
  %276 = vrot.lane.b32.xlu0 %v243, 120
  %v277 = vpop.permute.xlu0 %276
  %278 = vrot.lane.b32.xlu0 %v244, 120
  %v279 = vpop.permute.xlu0 %278
  %280 = vrot.lane.b32.xlu0 %v245, 120
  %v281 = vpop.permute.xlu0 %280
  %282 = vrot.lane.b32.xlu0 %v246, 120
  %v283 = vpop.permute.xlu0 %282
  %284 = vrot.lane.b32.xlu0 %v247, 120
  %v285 = vpop.permute.xlu0 %284
  %286 = vrot.lane.b32.xlu0 %v248, 120
  %v287 = vpop.permute.xlu0 %286
  %288 = vrot.lane.b32.xlu0 %v249, 120
  %v289 = vpop.permute.xlu0 %288
  %290 = vrot.lane.b32.xlu0 %v250, 120
  %v291 = vpop.permute.xlu0 %290
  %292 = vrot.lane.b32.xlu0 %v251, 120
  %v293 = vpop.permute.xlu0 %292
  %294 = vrot.lane.b32.xlu0 %v252, 120
  %v295 = vpop.permute.xlu0 %294
  %296 = vrot.lane.b32.xlu0 %v253, 120
  %v297 = vpop.permute.xlu0 %296
  %298 = vrot.lane.b32.xlu0 %v254, 120
  %v299 = vpop.permute.xlu0 %298
  %300 = vrot.lane.b32.xlu0 %v255, 120
  %v301 = vpop.permute.xlu0 %300
  %302 = vrot.lane.b32.xlu0 %v256, 120
  %v303 = vpop.permute.xlu0 %302
  %304 = vrot.lane.b32.xlu0 %v257, 120
  %v305 = vpop.permute.xlu0 %304
  %v322 = vadd.f32 %v242, %v275
  %v323 = vadd.f32 %v243, %v277
  %v324 = vadd.f32 %v244, %v279
  %v325 = vadd.f32 %v245, %v281
  %v326 = vadd.f32 %v246, %v283
  %v327 = vadd.f32 %v247, %v285
  %v328 = vadd.f32 %v248, %v287
  %v329 = vadd.f32 %v249, %v289
  %v330 = vadd.f32 %v250, %v291
  %v331 = vadd.f32 %v251, %v293
  %v332 = vadd.f32 %v252, %v295
  %v333 = vadd.f32 %v253, %v297
  %v334 = vadd.f32 %v254, %v299
  %v335 = vadd.f32 %v255, %v301
  %v336 = vadd.f32 %v256, %v303
  %v337 = vadd.f32 %v257, %v305
  %338 = vrot.lane.b32.xlu0 %v242, 112
  %v339 = vpop.permute.xlu0 %338
  %340 = vrot.lane.b32.xlu0 %v243, 112
  %v341 = vpop.permute.xlu0 %340
  %342 = vrot.lane.b32.xlu0 %v244, 112
  %v343 = vpop.permute.xlu0 %342
  %344 = vrot.lane.b32.xlu0 %v245, 112
  %v345 = vpop.permute.xlu0 %344
  %346 = vrot.lane.b32.xlu0 %v246, 112
  %v347 = vpop.permute.xlu0 %346
  %348 = vrot.lane.b32.xlu0 %v247, 112
  %v349 = vpop.permute.xlu0 %348
  %350 = vrot.lane.b32.xlu0 %v248, 112
  %v351 = vpop.permute.xlu0 %350
  %352 = vrot.lane.b32.xlu0 %v249, 112
  %v353 = vpop.permute.xlu0 %352
  %354 = vrot.lane.b32.xlu0 %v250, 112
  %v355 = vpop.permute.xlu0 %354
  %356 = vrot.lane.b32.xlu0 %v251, 112
  %v357 = vpop.permute.xlu0 %356
  %358 = vrot.lane.b32.xlu0 %v252, 112
  %v359 = vpop.permute.xlu0 %358
  %360 = vrot.lane.b32.xlu0 %v253, 112
  %v361 = vpop.permute.xlu0 %360
  %362 = vrot.lane.b32.xlu0 %v254, 112
  %v363 = vpop.permute.xlu0 %362
  %364 = vrot.lane.b32.xlu0 %v255, 112
  %v365 = vpop.permute.xlu0 %364
  %366 = vrot.lane.b32.xlu0 %v256, 112
  %v367 = vpop.permute.xlu0 %366
  %368 = vrot.lane.b32.xlu0 %v257, 112
  %v369 = vpop.permute.xlu0 %368
  %v386 = vadd.f32 %v322, %v339
  %v387 = vadd.f32 %v323, %v341
  %v388 = vadd.f32 %v324, %v343
  %v389 = vadd.f32 %v325, %v345
  %v390 = vadd.f32 %v326, %v347
  %v391 = vadd.f32 %v327, %v349
  %v392 = vadd.f32 %v328, %v351
  %v393 = vadd.f32 %v329, %v353
  %v394 = vadd.f32 %v330, %v355
  %v395 = vadd.f32 %v331, %v357
  %v396 = vadd.f32 %v332, %v359
  %v397 = vadd.f32 %v333, %v361
  %v398 = vadd.f32 %v334, %v363
  %v399 = vadd.f32 %v335, %v365
  %v400 = vadd.f32 %v336, %v367
  %v401 = vadd.f32 %v337, %v369
  %402 = vrot.lane.b32.xlu0 %v242, 104
  %v403 = vpop.permute.xlu0 %402
  %404 = vrot.lane.b32.xlu0 %v243, 104
  %v405 = vpop.permute.xlu0 %404
  %406 = vrot.lane.b32.xlu0 %v244, 104
  %v407 = vpop.permute.xlu0 %406
  %408 = vrot.lane.b32.xlu0 %v245, 104
  %v409 = vpop.permute.xlu0 %408
  %410 = vrot.lane.b32.xlu0 %v246, 104
  %v411 = vpop.permute.xlu0 %410
  %412 = vrot.lane.b32.xlu0 %v247, 104
  %v413 = vpop.permute.xlu0 %412
  %414 = vrot.lane.b32.xlu0 %v248, 104
  %v415 = vpop.permute.xlu0 %414
  %416 = vrot.lane.b32.xlu0 %v249, 104
  %v417 = vpop.permute.xlu0 %416
  %418 = vrot.lane.b32.xlu0 %v250, 104
  %v419 = vpop.permute.xlu0 %418
  %420 = vrot.lane.b32.xlu0 %v251, 104
  %v421 = vpop.permute.xlu0 %420
  %422 = vrot.lane.b32.xlu0 %v252, 104
  %v423 = vpop.permute.xlu0 %422
  %424 = vrot.lane.b32.xlu0 %v253, 104
  %v425 = vpop.permute.xlu0 %424
  %426 = vrot.lane.b32.xlu0 %v254, 104
  %v427 = vpop.permute.xlu0 %426
  %428 = vrot.lane.b32.xlu0 %v255, 104
  %v429 = vpop.permute.xlu0 %428
  %430 = vrot.lane.b32.xlu0 %v256, 104
  %v431 = vpop.permute.xlu0 %430
  %432 = vrot.lane.b32.xlu0 %v257, 104
  %v433 = vpop.permute.xlu0 %432
  %v450 = vadd.f32 %v386, %v403
  %v451 = vadd.f32 %v387, %v405
  %v452 = vadd.f32 %v388, %v407
  %v453 = vadd.f32 %v389, %v409
  %v454 = vadd.f32 %v390, %v411
  %v455 = vadd.f32 %v391, %v413
  %v456 = vadd.f32 %v392, %v415
  %v457 = vadd.f32 %v393, %v417
  %v458 = vadd.f32 %v394, %v419
  %v459 = vadd.f32 %v395, %v421
  %v460 = vadd.f32 %v396, %v423
  %v461 = vadd.f32 %v397, %v425
  %v462 = vadd.f32 %v398, %v427
  %v463 = vadd.f32 %v399, %v429
  %v464 = vadd.f32 %v400, %v431
  %v465 = vadd.f32 %v401, %v433
  %v466 = vmul.f32 %v450, 0.25
  %v467 = vmul.f32 %v451, 0.25
  %v468 = vmul.f32 %v452, 0.25
  %v469 = vmul.f32 %v453, 0.25
  %v470 = vmul.f32 %v454, 0.25
  %v471 = vmul.f32 %v455, 0.25
  %v472 = vmul.f32 %v456, 0.25
  %v473 = vmul.f32 %v457, 0.25
  %v474 = vmul.f32 %v458, 0.25
  %v475 = vmul.f32 %v459, 0.25
  %v476 = vmul.f32 %v460, 0.25
  %v477 = vmul.f32 %v461, 0.25
  %v478 = vmul.f32 %v462, 0.25
  %v479 = vmul.f32 %v463, 0.25
  %v480 = vmul.f32 %v464, 0.25
  %v481 = vmul.f32 %v465, 0.25
  %v482 = vmax.f32 %v466, 0.0
  %v483 = vmax.f32 %v467, 0.0
  %v484 = vmax.f32 %v468, 0.0
  %v485 = vmax.f32 %v469, 0.0
  %v486 = vmax.f32 %v470, 0.0
  %v487 = vmax.f32 %v471, 0.0
  %v488 = vmax.f32 %v472, 0.0
  %v489 = vmax.f32 %v473, 0.0
  %v490 = vmax.f32 %v474, 0.0
  %v491 = vmax.f32 %v475, 0.0
  %v492 = vmax.f32 %v476, 0.0
  %v493 = vmax.f32 %v477, 0.0
  %v494 = vmax.f32 %v478, 0.0
  %v495 = vmax.f32 %v479, 0.0
  %v496 = vmax.f32 %v480, 0.0
  %v497 = vmax.f32 %v481, 0.0
  %v498 = vsub.f32 %v482, %v466
  %v499 = vsub.f32 %v483, %v467
  %v500 = vsub.f32 %v484, %v468
  %v501 = vsub.f32 %v485, %v469
  %v502 = vsub.f32 %v486, %v470
  %v503 = vsub.f32 %v487, %v471
  %v504 = vsub.f32 %v488, %v472
  %v505 = vsub.f32 %v489, %v473
  %v506 = vsub.f32 %v490, %v474
  %v507 = vsub.f32 %v491, %v475
  %v508 = vsub.f32 %v492, %v476
  %v509 = vsub.f32 %v493, %v477
  %v510 = vsub.f32 %v494, %v478
  %v511 = vsub.f32 %v495, %v479
  %v512 = vsub.f32 %v496, %v480
  %v513 = vsub.f32 %v497, %v481
  %v514 = vadd.f32 %v242, %v498
  %v515 = vadd.f32 %v243, %v499
  %v516 = vadd.f32 %v244, %v500
  %v517 = vadd.f32 %v245, %v501
  %v518 = vadd.f32 %v246, %v502
  %v519 = vadd.f32 %v247, %v503
  %v520 = vadd.f32 %v248, %v504
  %v521 = vadd.f32 %v249, %v505
  %v522 = vadd.f32 %v250, %v506
  %v523 = vadd.f32 %v251, %v507
  %v524 = vadd.f32 %v252, %v508
  %v525 = vadd.f32 %v253, %v509
  %v526 = vadd.f32 %v254, %v510
  %v527 = vadd.f32 %v255, %v511
  %v528 = vadd.f32 %v256, %v512
  %v529 = vadd.f32 %v257, %v513
  %546 = vrot.lane.b32.xlu0 %v498, 8
  %v547 = vpop.permute.xlu0 %546
  %548 = vrot.lane.b32.xlu0 %v499, 8
  %v549 = vpop.permute.xlu0 %548
  %550 = vrot.lane.b32.xlu0 %v500, 8
  %v551 = vpop.permute.xlu0 %550
  %552 = vrot.lane.b32.xlu0 %v501, 8
  %v553 = vpop.permute.xlu0 %552
  %554 = vrot.lane.b32.xlu0 %v502, 8
  %v555 = vpop.permute.xlu0 %554
  %556 = vrot.lane.b32.xlu0 %v503, 8
  %v557 = vpop.permute.xlu0 %556
  %558 = vrot.lane.b32.xlu0 %v504, 8
  %v559 = vpop.permute.xlu0 %558
  %560 = vrot.lane.b32.xlu0 %v505, 8
  %v561 = vpop.permute.xlu0 %560
  %562 = vrot.lane.b32.xlu0 %v506, 8
  %v563 = vpop.permute.xlu0 %562
  %564 = vrot.lane.b32.xlu0 %v507, 8
  %v565 = vpop.permute.xlu0 %564
  %566 = vrot.lane.b32.xlu0 %v508, 8
  %v567 = vpop.permute.xlu0 %566
  %568 = vrot.lane.b32.xlu0 %v509, 8
  %v569 = vpop.permute.xlu0 %568
  %570 = vrot.lane.b32.xlu0 %v510, 8
  %v571 = vpop.permute.xlu0 %570
  %572 = vrot.lane.b32.xlu0 %v511, 8
  %v573 = vpop.permute.xlu0 %572
  %574 = vrot.lane.b32.xlu0 %v512, 8
  %v575 = vpop.permute.xlu0 %574
  %576 = vrot.lane.b32.xlu0 %v513, 8
  %v577 = vpop.permute.xlu0 %576
  %v594 = vadd.f32 %v242, %v547
  %v595 = vadd.f32 %v243, %v549
  %v596 = vadd.f32 %v244, %v551
  %v597 = vadd.f32 %v245, %v553
  %v598 = vadd.f32 %v246, %v555
  %v599 = vadd.f32 %v247, %v557
  %v600 = vadd.f32 %v248, %v559
  %v601 = vadd.f32 %v249, %v561
  %v602 = vadd.f32 %v250, %v563
  %v603 = vadd.f32 %v251, %v565
  %v604 = vadd.f32 %v252, %v567
  %v605 = vadd.f32 %v253, %v569
  %v606 = vadd.f32 %v254, %v571
  %v607 = vadd.f32 %v255, %v573
  %v608 = vadd.f32 %v256, %v575
  %v609 = vadd.f32 %v257, %v577
  %610 = vrot.lane.b32.xlu0 %v498, 16
  %v611 = vpop.permute.xlu0 %610
  %612 = vrot.lane.b32.xlu0 %v499, 16
  %v613 = vpop.permute.xlu0 %612
  %614 = vrot.lane.b32.xlu0 %v500, 16
  %v615 = vpop.permute.xlu0 %614
  %616 = vrot.lane.b32.xlu0 %v501, 16
  %v617 = vpop.permute.xlu0 %616
  %618 = vrot.lane.b32.xlu0 %v502, 16
  %v619 = vpop.permute.xlu0 %618
  %620 = vrot.lane.b32.xlu0 %v503, 16
  %v621 = vpop.permute.xlu0 %620
  %622 = vrot.lane.b32.xlu0 %v504, 16
  %v623 = vpop.permute.xlu0 %622
  %624 = vrot.lane.b32.xlu0 %v505, 16
  %v625 = vpop.permute.xlu0 %624
  %626 = vrot.lane.b32.xlu0 %v506, 16
  %v627 = vpop.permute.xlu0 %626
  %628 = vrot.lane.b32.xlu0 %v507, 16
  %v629 = vpop.permute.xlu0 %628
  %630 = vrot.lane.b32.xlu0 %v508, 16
  %v631 = vpop.permute.xlu0 %630
  %632 = vrot.lane.b32.xlu0 %v509, 16
  %v633 = vpop.permute.xlu0 %632
  %634 = vrot.lane.b32.xlu0 %v510, 16
  %v635 = vpop.permute.xlu0 %634
  %636 = vrot.lane.b32.xlu0 %v511, 16
  %v637 = vpop.permute.xlu0 %636
  %638 = vrot.lane.b32.xlu0 %v512, 16
  %v639 = vpop.permute.xlu0 %638
  %640 = vrot.lane.b32.xlu0 %v513, 16
  %v641 = vpop.permute.xlu0 %640
  %v658 = vadd.f32 %v242, %v611
  %v659 = vadd.f32 %v243, %v613
  %v660 = vadd.f32 %v244, %v615
  %v661 = vadd.f32 %v245, %v617
  %v662 = vadd.f32 %v246, %v619
  %v663 = vadd.f32 %v247, %v621
  %v664 = vadd.f32 %v248, %v623
  %v665 = vadd.f32 %v249, %v625
  %v666 = vadd.f32 %v250, %v627
  %v667 = vadd.f32 %v251, %v629
  %v668 = vadd.f32 %v252, %v631
  %v669 = vadd.f32 %v253, %v633
  %v670 = vadd.f32 %v254, %v635
  %v671 = vadd.f32 %v255, %v637
  %v672 = vadd.f32 %v256, %v639
  %v673 = vadd.f32 %v257, %v641
  %674 = vrot.lane.b32.xlu0 %v498, 24
  %v675 = vpop.permute.xlu0 %674
  %676 = vrot.lane.b32.xlu0 %v499, 24
  %v677 = vpop.permute.xlu0 %676
  %678 = vrot.lane.b32.xlu0 %v500, 24
  %v679 = vpop.permute.xlu0 %678
  %680 = vrot.lane.b32.xlu0 %v501, 24
  %v681 = vpop.permute.xlu0 %680
  %682 = vrot.lane.b32.xlu0 %v502, 24
  %v683 = vpop.permute.xlu0 %682
  %684 = vrot.lane.b32.xlu0 %v503, 24
  %v685 = vpop.permute.xlu0 %684
  %686 = vrot.lane.b32.xlu0 %v504, 24
  %v687 = vpop.permute.xlu0 %686
  %688 = vrot.lane.b32.xlu0 %v505, 24
  %v689 = vpop.permute.xlu0 %688
  %690 = vrot.lane.b32.xlu0 %v506, 24
  %v691 = vpop.permute.xlu0 %690
  %692 = vrot.lane.b32.xlu0 %v507, 24
  %v693 = vpop.permute.xlu0 %692
  %694 = vrot.lane.b32.xlu0 %v508, 24
  %v695 = vpop.permute.xlu0 %694
  %696 = vrot.lane.b32.xlu0 %v509, 24
  %v697 = vpop.permute.xlu0 %696
  %698 = vrot.lane.b32.xlu0 %v510, 24
  %v699 = vpop.permute.xlu0 %698
  %700 = vrot.lane.b32.xlu0 %v511, 24
  %v701 = vpop.permute.xlu0 %700
  %702 = vrot.lane.b32.xlu0 %v512, 24
  %v703 = vpop.permute.xlu0 %702
  %704 = vrot.lane.b32.xlu0 %v513, 24
  %v705 = vpop.permute.xlu0 %704
  %v722 = vadd.f32 %v242, %v675
  %v723 = vadd.f32 %v243, %v677
  %v724 = vadd.f32 %v244, %v679
  %v725 = vadd.f32 %v245, %v681
  %v726 = vadd.f32 %v246, %v683
  %v727 = vadd.f32 %v247, %v685
  %v728 = vadd.f32 %v248, %v687
  %v729 = vadd.f32 %v249, %v689
  %v730 = vadd.f32 %v250, %v691
  %v731 = vadd.f32 %v251, %v693
  %v732 = vadd.f32 %v252, %v695
  %v733 = vadd.f32 %v253, %v697
  %v734 = vadd.f32 %v254, %v699
  %v735 = vadd.f32 %v255, %v701
  %v736 = vadd.f32 %v256, %v703
  %v737 = vadd.f32 %v257, %v705
  %vm738 = vcmask 64512
  %v739 = vsel %vm738, %v514, %v594
  %v740 = vsel %vm738, %v515, %v595
  %v741 = vsel %vm738, %v516, %v596
  %v742 = vsel %vm738, %v517, %v597
  %v743 = vsel %vm738, %v518, %v598
  %v744 = vsel %vm738, %v519, %v599
  %v745 = vsel %vm738, %v520, %v600
  %v746 = vsel %vm738, %v521, %v601
  %v747 = vsel %vm738, %v522, %v602
  %v748 = vsel %vm738, %v523, %v603
  %v749 = vsel %vm738, %v524, %v604
  %v750 = vsel %vm738, %v525, %v605
  %v751 = vsel %vm738, %v526, %v606
  %v752 = vsel %vm738, %v527, %v607
  %v753 = vsel %vm738, %v528, %v608
  %v754 = vsel %vm738, %v529, %v609
  %vm755 = vcmask 130048
  %v756 = vsel %vm755, %v739, %v658
  %v757 = vsel %vm755, %v740, %v659
  %v758 = vsel %vm755, %v741, %v660
  %v759 = vsel %vm755, %v742, %v661
  %v760 = vsel %vm755, %v743, %v662
  %v761 = vsel %vm755, %v744, %v663
  %v762 = vsel %vm755, %v745, %v664
  %v763 = vsel %vm755, %v746, %v665
  %v764 = vsel %vm755, %v747, %v666
  %v765 = vsel %vm755, %v748, %v667
  %v766 = vsel %vm755, %v749, %v668
  %v767 = vsel %vm755, %v750, %v669
  %v768 = vsel %vm755, %v751, %v670
  %v769 = vsel %vm755, %v752, %v671
  %v770 = vsel %vm755, %v753, %v672
  %v771 = vsel %vm755, %v754, %v673
  %vm772 = vcmask 195584
  %v773 = vsel %vm772, %v756, %v722
  %v774 = vsel %vm772, %v757, %v723
  %v775 = vsel %vm772, %v758, %v724
  %v776 = vsel %vm772, %v759, %v725
  %v777 = vsel %vm772, %v760, %v726
  %v778 = vsel %vm772, %v761, %v727
  %v779 = vsel %vm772, %v762, %v728
  %v780 = vsel %vm772, %v763, %v729
  %v781 = vsel %vm772, %v764, %v730
  %v782 = vsel %vm772, %v765, %v731
  %v783 = vsel %vm772, %v766, %v732
  %v784 = vsel %vm772, %v767, %v733
  %v785 = vsel %vm772, %v768, %v734
  %v786 = vsel %vm772, %v769, %v735
  %v787 = vsel %vm772, %v770, %v736
  %v788 = vsel %vm772, %v771, %v737
  %v789 = vpack.c.bf16 %v774, %v773
  %v790 = vpack.c.bf16 %v776, %v775
  %v791 = vpack.c.bf16 %v778, %v777
  %v792 = vpack.c.bf16 %v780, %v779
  %v793 = vpack.c.bf16 %v782, %v781
  %v794 = vpack.c.bf16 %v784, %v783
  %v795 = vpack.c.bf16 %v786, %v785
  %v796 = vpack.c.bf16 %v788, %v787
  %v805 = vunpack.c.l.b16 %v789
  %v806 = vunpack.c.h.b16 %v789
  %v807 = vunpack.c.l.b16 %v790
  %v808 = vunpack.c.h.b16 %v790
  %v809 = vunpack.c.l.b16 %v791
  %v810 = vunpack.c.h.b16 %v791
  %v811 = vunpack.c.l.b16 %v792
  %v812 = vunpack.c.h.b16 %v792
  %v813 = vunpack.c.l.b16 %v793
  %v814 = vunpack.c.h.b16 %v793
  %v815 = vunpack.c.l.b16 %v794
  %v816 = vunpack.c.h.b16 %v794
  %v817 = vunpack.c.l.b16 %v795
  %v818 = vunpack.c.h.b16 %v795
  %v819 = vunpack.c.l.b16 %v796
  %v820 = vunpack.c.h.b16 %v796
  %v821 = vpack.c.b16 %v805, %v805
  %v822 = vpack.c.b16 %v806, %v806
  %v823 = vpack.c.b16 %v807, %v807
  %v824 = vpack.c.b16 %v808, %v808
  %v825 = vpack.c.b16 %v809, %v809
  %v826 = vpack.c.b16 %v810, %v810
  %v827 = vpack.c.b16 %v811, %v811
  %v828 = vpack.c.b16 %v812, %v812
  %v829 = vpack.c.b16 %v813, %v813
  %v830 = vpack.c.b16 %v814, %v814
  %v831 = vpack.c.b16 %v815, %v815
  %v832 = vpack.c.b16 %v816, %v816
  %v833 = vpack.c.b16 %v817, %v817
  %v834 = vpack.c.b16 %v818, %v818
  %v835 = vpack.c.b16 %v819, %v819
  %v836 = vpack.c.b16 %v820, %v820
  %vm853 = vcmask 257024
  %854 = vst.msk [vmem:[%s4] sm:$0xf] %vm853, %v821
  %855 = vst.msk [vmem:[%s4 + $0x4] sm:$0xf] %vm853, %v822
  %856 = vst.msk [vmem:[%s4 + $0x8] sm:$0xf] %vm853, %v823
  %857 = vst.msk [vmem:[%s4 + $0xc] sm:$0xf] %vm853, %v824
  %858 = vst.msk [vmem:[%s4 + $0x10] sm:$0xf] %vm853, %v825
  %859 = vst.msk [vmem:[%s4 + $0x14] sm:$0xf] %vm853, %v826
  %860 = vst.msk [vmem:[%s4 + $0x18] sm:$0xf] %vm853, %v827
  %861 = vst.msk [vmem:[%s4 + $0x1c] sm:$0xf] %vm853, %v828
  %862 = vst.msk [vmem:[%s4 + $0x20] sm:$0xf] %vm853, %v829
  %863 = vst.msk [vmem:[%s4 + $0x24] sm:$0xf] %vm853, %v830
  %864 = vst.msk [vmem:[%s4 + $0x28] sm:$0xf] %vm853, %v831
  %865 = vst.msk [vmem:[%s4 + $0x2c] sm:$0xf] %vm853, %v832
  %866 = vst.msk [vmem:[%s4 + $0x30] sm:$0xf] %vm853, %v833
  %867 = vst.msk [vmem:[%s4 + $0x34] sm:$0xf] %vm853, %v834
  %868 = vst.msk [vmem:[%s4 + $0x38] sm:$0xf] %vm853, %v835
  %869 = vst.msk [vmem:[%s4 + $0x3c] sm:$0xf] %vm853, %v836
  // Predicated region
  $region18: #{tpu_custom_call.1} parent=0 // pred_check
    _
  $region19: #{tpu_custom_call.1} parent=0 // pred_check_branch
    %871 = sbr.rel (0) target = $region21
  $region20: #{tpu_custom_call.1} parent=0 // pred_region
    _
  $region21: #{tpu_custom_call.1} parent=0 // pred_fallthru
    _
  // Predicated region
  $region22: #{tpu_custom_call.1} parent=0 // pred_check
    _
  $region23: #{tpu_custom_call.1} parent=0 // pred_check_branch
    %873 = sbr.rel (0) target = $region25
  $region24: #{tpu_custom_call.1} parent=0 // pred_region
    _
  $region25: #{tpu_custom_call.1} parent=0 // pred_fallthru
    _

</llo_original>
